<compile_context>
chip_gen: v5e
topology: v5e:2x2
jax: 0.10.0
libtpu: 0.0.40
codegen_flags: <defaults>
</compile_context>

<pallas_src>
import math

import jax
import jax.numpy as jnp
from jax.experimental import pallas as pl
from jax.experimental.pallas import tpu as pltpu

# ----------------------------- model config ---------------------------------
HIDDEN = 32          # hidden_size
INTER = 64           # intermediate_size
NUM_HEADS = 4        # num_attention_heads
HEAD = HIDDEN // NUM_HEADS
SEQ = 8              # sequence length
BATCH = 2
EPS = 1e-12


def _layernorm(x, gamma, beta):
    # matches LayerNorm in the PyTorch module (biased variance, eps inside sqrt)
    u = jnp.mean(x, axis=-1, keepdims=True)
    c = x - u
    s = jnp.mean(c * c, axis=-1, keepdims=True)
    return gamma * (c * jax.lax.rsqrt(s + EPS)) + beta


# ------------------------------- kernel --------------------------------------
def encoder_kernel(x_ref, mask_ref,
                   wqkv_ref, bqkv_ref,
                   wao_ref, bao_ref, g1_ref, b1_ref,
                   wi_ref, bi_ref, wo_ref, bo_ref, g2_ref, b2_ref,
                   out_ref, ctx_ref):
    x = x_ref[...]                      # (B*S, H)
    mask = mask_ref[...]                # (B, S, S) additive attention mask

    # ---- fused Q/K/V projection (Q already pre-scaled by 1/sqrt(head_dim)) ----
    qkv = jnp.dot(x, wqkv_ref[...], preferred_element_type=jnp.float32) + bqkv_ref[...]
    q = qkv[:, 0 * HIDDEN:1 * HIDDEN].reshape(BATCH, SEQ, HIDDEN)
    k = qkv[:, 1 * HIDDEN:2 * HIDDEN].reshape(BATCH, SEQ, HIDDEN)
    v = qkv[:, 2 * HIDDEN:3 * HIDDEN].reshape(BATCH, SEQ, HIDDEN)

    # ---- per-head attention, batched over the batch dim; results written
    #      into a VMEM scratch slab (no concatenates) ----
    for h in range(NUM_HEADS):          # static unroll over heads
        lo = h * HEAD
        qh = q[:, :, lo:lo + HEAD]      # (B, S, d)
        kh = k[:, :, lo:lo + HEAD]
        vh = v[:, :, lo:lo + HEAD]
        s = jnp.einsum('bqd,bkd->bqk', qh, kh,
                       preferred_element_type=jnp.float32) + mask
        s = s - jnp.max(s, axis=-1, keepdims=True)
        e = jnp.exp(s)
        p = e / jnp.sum(e, axis=-1, keepdims=True)
        ctx_ref[:, :, lo:lo + HEAD] = jnp.einsum(
            'bqk,bkd->bqd', p, vh, preferred_element_type=jnp.float32)

    context = ctx_ref[...].reshape(BATCH * SEQ, HIDDEN)   # (B*S, H)

    # ---- SelfOutput: dense + residual + LayerNorm ----
    attn = jnp.dot(context, wao_ref[...],
                   preferred_element_type=jnp.float32) + bao_ref[...]
    attn = _layernorm(attn + x, g1_ref[...], b1_ref[...])

    # ---- Intermediate: dense + relu ----
    inter = jnp.dot(attn, wi_ref[...],
                    preferred_element_type=jnp.float32) + bi_ref[...]
    inter = jnp.maximum(inter, 0.0)

    # ---- Output: dense + residual + LayerNorm ----
    out = jnp.dot(inter, wo_ref[...],
                  preferred_element_type=jnp.float32) + bo_ref[...]
    out_ref[...] = _layernorm(out + attn, g2_ref[...], b2_ref[...])


# ------------------------------- wrapper --------------------------------------
def encoder_forward(hidden_states, attention_mask, params):
    """hidden_states: (B, S, H) f32; attention_mask: (B, 1, 1, S) additive mask."""
    B, S, H = hidden_states.shape

    # Fold the 1/sqrt(head_dim) score scaling into the Q projection and fuse
    # Q/K/V weights into a single (H, 3H) matmul.
    inv = 1.0 / math.sqrt(HEAD)
    wqkv = jnp.concatenate(
        [params["wq"] * inv, params["wk"], params["wv"]], axis=1)
    bqkv = jnp.concatenate(
        [params["bq"] * inv, params["bk"], params["bv"]], axis=1)

    x_flat = hidden_states.reshape(B * S, H)
    mask = jnp.broadcast_to(
        attention_mask.reshape(B, 1, S).astype(jnp.float32), (B, S, S))

    args = (x_flat, mask, wqkv, bqkv,
            params["wao"], params["bao"], params["g1"], params["b1"],
            params["wi"], params["bi"], params["wo"], params["bo"],
            params["g2"], params["b2"])

    vmem_spec = pl.BlockSpec(memory_space=pltpu.MemorySpace.VMEM)

    out_flat = pl.pallas_call(
        encoder_kernel,
        out_shape=jax.ShapeDtypeStruct((B * S, H), jnp.float32),
        in_specs=[vmem_spec] * len(args),
        out_specs=vmem_spec,
        scratch_shapes=[pltpu.VMEM((B, S, H), jnp.float32)],
    )(*args)
    return out_flat.reshape(B, S, H)


# ---------------------------- parameter init ----------------------------------
def init_params(key):
    ks = jax.random.split(key, 12)

    def lin(k, fan_in, fan_out):
        # deterministic small-scale init; weight stored as (in, out) for x @ W
        bound = 1.0 / math.sqrt(fan_in)
        kw, kb = jax.random.split(k)
        w = jax.random.uniform(kw, (fan_in, fan_out), jnp.float32, -bound, bound)
        b = jax.random.uniform(kb, (1, fan_out), jnp.float32, -bound, bound)
        return w, b

    wq, bq = lin(ks[0], HIDDEN, HIDDEN)
    wk, bk = lin(ks[1], HIDDEN, HIDDEN)
    wv, bv = lin(ks[2], HIDDEN, HIDDEN)
    wao, bao = lin(ks[3], HIDDEN, HIDDEN)
    wi, bi = lin(ks[4], HIDDEN, INTER)
    wo, bo = lin(ks[5], INTER, HIDDEN)
    return dict(
        wq=wq, bq=bq, wk=wk, bk=bk, wv=wv, bv=bv,
        wao=wao, bao=bao,
        g1=jnp.ones((1, HIDDEN), jnp.float32), b1=jnp.zeros((1, HIDDEN), jnp.float32),
        wi=wi, bi=bi, wo=wo, bo=bo,
        g2=jnp.ones((1, HIDDEN), jnp.float32), b2=jnp.zeros((1, HIDDEN), jnp.float32),
    )


# ---------------------------- pure-JAX reference -------------------------------
def encoder_ref(hidden_states, attention_mask, p):
    B, S, H = hidden_states.shape
    x = hidden_states
    q = x @ p["wq"] + p["bq"]
    k = x @ p["wk"] + p["bk"]
    v = x @ p["wv"] + p["bv"]

    def split_heads(t):
        return t.reshape(B, S, NUM_HEADS, HEAD).transpose(0, 2, 1, 3)

    qh, kh, vh = split_heads(q), split_heads(k), split_heads(v)
    scores = jnp.einsum("bhqd,bhkd->bhqk", qh, kh) / math.sqrt(HEAD)
    scores = scores + attention_mask                     # (B,1,1,S) broadcast
    probs = jax.nn.softmax(scores, axis=-1)
    ctx = jnp.einsum("bhqk,bhkd->bhqd", probs, vh)
    ctx = ctx.transpose(0, 2, 1, 3).reshape(B, S, H)

    def ln(t, g, b):
        u = jnp.mean(t, axis=-1, keepdims=True)
        s = jnp.mean((t - u) ** 2, axis=-1, keepdims=True)
        return g * ((t - u) / jnp.sqrt(s + EPS)) + b

    attn = ln(ctx @ p["wao"] + p["bao"] + x, p["g1"], p["b1"])
    inter = jax.nn.relu(attn @ p["wi"] + p["bi"])
    out = ln(inter @ p["wo"] + p["bo"] + attn, p["g2"], p["b2"])
    return out


# --------------------------------- main ----------------------------------------
if __name__ == "__main__":
    key = jax.random.PRNGKey(0)
    k_x, k_m, k_p = jax.random.split(key, 3)

    hidden_states = jax.random.normal(k_x, (BATCH, SEQ, HIDDEN), jnp.float32)
    # typical BERT extended attention mask: 0 for attend, -10000 for masked
    keep = (jax.random.uniform(k_m, (BATCH, 1, 1, SEQ)) > 0.2).astype(jnp.float32)
    attention_mask = (1.0 - keep) * -10000.0

    params = init_params(k_p)

    fwd = jax.jit(encoder_forward)
    out = fwd(hidden_states, attention_mask, params)
    out = jax.block_until_ready(out)

    ref = encoder_ref(hidden_states, attention_mask, params)
    assert out.shape == (BATCH, SEQ, HIDDEN)
    assert jnp.allclose(out, ref, atol=1e-4, rtol=1e-4), \
        f"max abs err {jnp.max(jnp.abs(out - ref))}"

    print("KERNEL_OK")
</pallas_src>

<mosaic_0001>
module attributes {stable_mosaic.version = 11 : i64} {
  func.func @encoder_kernel(%arg0: memref<16x32xf32, #tpu.memory_space<vmem>>, %arg1: memref<2x8x8xf32, #tpu.memory_space<vmem>>, %arg2: memref<32x96xf32, #tpu.memory_space<vmem>>, %arg3: memref<1x96xf32, #tpu.memory_space<vmem>>, %arg4: memref<32x32xf32, #tpu.memory_space<vmem>>, %arg5: memref<1x32xf32, #tpu.memory_space<vmem>>, %arg6: memref<1x32xf32, #tpu.memory_space<vmem>>, %arg7: memref<1x32xf32, #tpu.memory_space<vmem>>, %arg8: memref<32x64xf32, #tpu.memory_space<vmem>>, %arg9: memref<1x64xf32, #tpu.memory_space<vmem>>, %arg10: memref<64x32xf32, #tpu.memory_space<vmem>>, %arg11: memref<1x32xf32, #tpu.memory_space<vmem>>, %arg12: memref<1x32xf32, #tpu.memory_space<vmem>>, %arg13: memref<1x32xf32, #tpu.memory_space<vmem>>, %arg14: memref<16x32xf32, #tpu.memory_space<vmem>>, %arg15: memref<2x8x32xf32, #tpu.memory_space<vmem>>) attributes {dimension_semantics = [], scalar_prefetch = 0 : i64, scratch_operands = 1 : i64, tpu.core_type = #tpu.core_type<tc>} {
    %c0 = arith.constant 0 : index
    %c0_0 = arith.constant 0 : index
    %0 = vector.load %arg0[%c0, %c0_0] : memref<16x32xf32, #tpu.memory_space<vmem>>, vector<16x32xf32>
    %c0_1 = arith.constant 0 : index
    %c0_2 = arith.constant 0 : index
    %c0_3 = arith.constant 0 : index
    %1 = vector.load %arg1[%c0_1, %c0_2, %c0_3] : memref<2x8x8xf32, #tpu.memory_space<vmem>>, vector<2x8x8xf32>
    %c0_4 = arith.constant 0 : index
    %c0_5 = arith.constant 0 : index
    %2 = vector.load %arg2[%c0_4, %c0_5] : memref<32x96xf32, #tpu.memory_space<vmem>>, vector<32x96xf32>
    %cst = arith.constant dense<0.000000e+00> : vector<16x96xf32>
    %3 = tpu.matmul %0, %2, %cst {dimension_numbers = #tpu.dot_dimension_numbers<[1], [0], [0], [1], [0, 0, 1, 1], [], []>} : vector<16x32xf32>, vector<32x96xf32>, vector<16x96xf32> -> vector<16x96xf32>
    %c0_6 = arith.constant 0 : index
    %c0_7 = arith.constant 0 : index
    %4 = vector.load %arg3[%c0_6, %c0_7] : memref<1x96xf32, #tpu.memory_space<vmem>>, vector<1x96xf32>
    %5 = vector.broadcast %4 : vector<1x96xf32> to vector<16x96xf32>
    %6 = arith.addf %3, %5 : vector<16x96xf32>
    %7 = vector.extract_strided_slice %6 {offsets = [0, 0], sizes = [16, 32], strides = [1, 1]} : vector<16x96xf32> to vector<16x32xf32>
    %8 = vector.shape_cast %7 : vector<16x32xf32> to vector<2x8x32xf32>
    %9 = vector.extract_strided_slice %6 {offsets = [0, 32], sizes = [16, 32], strides = [1, 1]} : vector<16x96xf32> to vector<16x32xf32>
    %10 = vector.shape_cast %9 : vector<16x32xf32> to vector<2x8x32xf32>
    %11 = vector.extract_strided_slice %6 {offsets = [0, 64], sizes = [16, 32], strides = [1, 1]} : vector<16x96xf32> to vector<16x32xf32>
    %12 = vector.shape_cast %11 : vector<16x32xf32> to vector<2x8x32xf32>
    %13 = vector.extract_strided_slice %8 {offsets = [0, 0, 0], sizes = [2, 8, 8], strides = [1, 1, 1]} : vector<2x8x32xf32> to vector<2x8x8xf32>
    %14 = vector.extract_strided_slice %10 {offsets = [0, 0, 0], sizes = [2, 8, 8], strides = [1, 1, 1]} : vector<2x8x32xf32> to vector<2x8x8xf32>
    %15 = vector.extract_strided_slice %12 {offsets = [0, 0, 0], sizes = [2, 8, 8], strides = [1, 1, 1]} : vector<2x8x32xf32> to vector<2x8x8xf32>
    "tpu.trace_start"() <{level = 10 : i32, message = "bqd,bkd->bqk"}> : () -> ()
    %cst_8 = arith.constant dense<0.000000e+00> : vector<2x8x8xf32>
    %16 = tpu.matmul %13, %14, %cst_8 {dimension_numbers = #tpu.dot_dimension_numbers<[2], [2], [1], [1], [0, 0, 0, 1, 1, 1], [0], [0]>} : vector<2x8x8xf32>, vector<2x8x8xf32>, vector<2x8x8xf32> -> vector<2x8x8xf32>
    "tpu.trace_stop"() : () -> ()
    %17 = arith.addf %16, %1 : vector<2x8x8xf32>
    %cst_9 = arith.constant dense<0xFF800000> : vector<2x8xf32>
    %18 = vector.multi_reduction <maximumf>, %17, %cst_9 [2] : vector<2x8x8xf32> to vector<2x8xf32>
    %19 = vector.shape_cast %18 : vector<2x8xf32> to vector<2x8x1xf32>
    %20 = vector.broadcast %19 : vector<2x8x1xf32> to vector<2x8x8xf32>
    %21 = arith.subf %17, %20 : vector<2x8x8xf32>
    %22 = math.exp %21 : vector<2x8x8xf32>
    %cst_10 = arith.constant dense<0.000000e+00> : vector<2x8xf32>
    %23 = vector.multi_reduction <add>, %22, %cst_10 [2] : vector<2x8x8xf32> to vector<2x8xf32>
    %24 = vector.shape_cast %23 : vector<2x8xf32> to vector<2x8x1xf32>
    %25 = vector.broadcast %24 : vector<2x8x1xf32> to vector<2x8x8xf32>
    %26 = arith.divf %22, %25 : vector<2x8x8xf32>
    "tpu.trace_start"() <{level = 10 : i32, message = "bqk,bkd->bqd"}> : () -> ()
    %cst_11 = arith.constant dense<0.000000e+00> : vector<2x8x8xf32>
    %27 = tpu.matmul %26, %15, %cst_11 {dimension_numbers = #tpu.dot_dimension_numbers<[2], [1], [1], [2], [0, 0, 0, 1, 1, 2], [0], [0]>} : vector<2x8x8xf32>, vector<2x8x8xf32>, vector<2x8x8xf32> -> vector<2x8x8xf32>
    "tpu.trace_stop"() : () -> ()
    %c0_12 = arith.constant 0 : index
    %c0_13 = arith.constant 0 : index
    %c0_14 = arith.constant 0 : index
    %28 = vector.load %arg15[%c0_12, %c0_13, %c0_14] : memref<2x8x32xf32, #tpu.memory_space<vmem>>, vector<2x8x8xf32>
    tpu.vector_store %arg15[%c0_12, %c0_13, %c0_14], %27 {strides = array<i32>} : memref<2x8x32xf32, #tpu.memory_space<vmem>>, vector<2x8x8xf32>,
    %29 = vector.extract_strided_slice %8 {offsets = [0, 0, 8], sizes = [2, 8, 8], strides = [1, 1, 1]} : vector<2x8x32xf32> to vector<2x8x8xf32>
    %30 = vector.extract_strided_slice %10 {offsets = [0, 0, 8], sizes = [2, 8, 8], strides = [1, 1, 1]} : vector<2x8x32xf32> to vector<2x8x8xf32>
    %31 = vector.extract_strided_slice %12 {offsets = [0, 0, 8], sizes = [2, 8, 8], strides = [1, 1, 1]} : vector<2x8x32xf32> to vector<2x8x8xf32>
    "tpu.trace_start"() <{level = 10 : i32, message = "bqd,bkd->bqk"}> : () -> ()
    %cst_15 = arith.constant dense<0.000000e+00> : vector<2x8x8xf32>
    %32 = tpu.matmul %29, %30, %cst_15 {dimension_numbers = #tpu.dot_dimension_numbers<[2], [2], [1], [1], [0, 0, 0, 1, 1, 1], [0], [0]>} : vector<2x8x8xf32>, vector<2x8x8xf32>, vector<2x8x8xf32> -> vector<2x8x8xf32>
    "tpu.trace_stop"() : () -> ()
    %33 = arith.addf %32, %1 : vector<2x8x8xf32>
    %cst_16 = arith.constant dense<0xFF800000> : vector<2x8xf32>
    %34 = vector.multi_reduction <maximumf>, %33, %cst_16 [2] : vector<2x8x8xf32> to vector<2x8xf32>
    %35 = vector.shape_cast %34 : vector<2x8xf32> to vector<2x8x1xf32>
    %36 = vector.broadcast %35 : vector<2x8x1xf32> to vector<2x8x8xf32>
    %37 = arith.subf %33, %36 : vector<2x8x8xf32>
    %38 = math.exp %37 : vector<2x8x8xf32>
    %cst_17 = arith.constant dense<0.000000e+00> : vector<2x8xf32>
    %39 = vector.multi_reduction <add>, %38, %cst_17 [2] : vector<2x8x8xf32> to vector<2x8xf32>
    %40 = vector.shape_cast %39 : vector<2x8xf32> to vector<2x8x1xf32>
    %41 = vector.broadcast %40 : vector<2x8x1xf32> to vector<2x8x8xf32>
    %42 = arith.divf %38, %41 : vector<2x8x8xf32>
    "tpu.trace_start"() <{level = 10 : i32, message = "bqk,bkd->bqd"}> : () -> ()
    %cst_18 = arith.constant dense<0.000000e+00> : vector<2x8x8xf32>
    %43 = tpu.matmul %42, %31, %cst_18 {dimension_numbers = #tpu.dot_dimension_numbers<[2], [1], [1], [2], [0, 0, 0, 1, 1, 2], [0], [0]>} : vector<2x8x8xf32>, vector<2x8x8xf32>, vector<2x8x8xf32> -> vector<2x8x8xf32>
    "tpu.trace_stop"() : () -> ()
    %c0_19 = arith.constant 0 : index
    %c0_20 = arith.constant 0 : index
    %c8 = arith.constant 8 : index
    %44 = vector.load %arg15[%c0_19, %c0_20, %c8] : memref<2x8x32xf32, #tpu.memory_space<vmem>>, vector<2x8x8xf32>
    tpu.vector_store %arg15[%c0_19, %c0_20, %c8], %43 {strides = array<i32>} : memref<2x8x32xf32, #tpu.memory_space<vmem>>, vector<2x8x8xf32>,
    %45 = vector.extract_strided_slice %8 {offsets = [0, 0, 16], sizes = [2, 8, 8], strides = [1, 1, 1]} : vector<2x8x32xf32> to vector<2x8x8xf32>
    %46 = vector.extract_strided_slice %10 {offsets = [0, 0, 16], sizes = [2, 8, 8], strides = [1, 1, 1]} : vector<2x8x32xf32> to vector<2x8x8xf32>
    %47 = vector.extract_strided_slice %12 {offsets = [0, 0, 16], sizes = [2, 8, 8], strides = [1, 1, 1]} : vector<2x8x32xf32> to vector<2x8x8xf32>
    "tpu.trace_start"() <{level = 10 : i32, message = "bqd,bkd->bqk"}> : () -> ()
    %cst_21 = arith.constant dense<0.000000e+00> : vector<2x8x8xf32>
    %48 = tpu.matmul %45, %46, %cst_21 {dimension_numbers = #tpu.dot_dimension_numbers<[2], [2], [1], [1], [0, 0, 0, 1, 1, 1], [0], [0]>} : vector<2x8x8xf32>, vector<2x8x8xf32>, vector<2x8x8xf32> -> vector<2x8x8xf32>
    "tpu.trace_stop"() : () -> ()
    %49 = arith.addf %48, %1 : vector<2x8x8xf32>
    %cst_22 = arith.constant dense<0xFF800000> : vector<2x8xf32>
    %50 = vector.multi_reduction <maximumf>, %49, %cst_22 [2] : vector<2x8x8xf32> to vector<2x8xf32>
    %51 = vector.shape_cast %50 : vector<2x8xf32> to vector<2x8x1xf32>
    %52 = vector.broadcast %51 : vector<2x8x1xf32> to vector<2x8x8xf32>
    %53 = arith.subf %49, %52 : vector<2x8x8xf32>
    %54 = math.exp %53 : vector<2x8x8xf32>
    %cst_23 = arith.constant dense<0.000000e+00> : vector<2x8xf32>
    %55 = vector.multi_reduction <add>, %54, %cst_23 [2] : vector<2x8x8xf32> to vector<2x8xf32>
    %56 = vector.shape_cast %55 : vector<2x8xf32> to vector<2x8x1xf32>
    %57 = vector.broadcast %56 : vector<2x8x1xf32> to vector<2x8x8xf32>
    %58 = arith.divf %54, %57 : vector<2x8x8xf32>
    "tpu.trace_start"() <{level = 10 : i32, message = "bqk,bkd->bqd"}> : () -> ()
    %cst_24 = arith.constant dense<0.000000e+00> : vector<2x8x8xf32>
    %59 = tpu.matmul %58, %47, %cst_24 {dimension_numbers = #tpu.dot_dimension_numbers<[2], [1], [1], [2], [0, 0, 0, 1, 1, 2], [0], [0]>} : vector<2x8x8xf32>, vector<2x8x8xf32>, vector<2x8x8xf32> -> vector<2x8x8xf32>
    "tpu.trace_stop"() : () -> ()
    %c0_25 = arith.constant 0 : index
    %c0_26 = arith.constant 0 : index
    %c16 = arith.constant 16 : index
    %60 = vector.load %arg15[%c0_25, %c0_26, %c16] : memref<2x8x32xf32, #tpu.memory_space<vmem>>, vector<2x8x8xf32>
    tpu.vector_store %arg15[%c0_25, %c0_26, %c16], %59 {strides = array<i32>} : memref<2x8x32xf32, #tpu.memory_space<vmem>>, vector<2x8x8xf32>,
    %61 = vector.extract_strided_slice %8 {offsets = [0, 0, 24], sizes = [2, 8, 8], strides = [1, 1, 1]} : vector<2x8x32xf32> to vector<2x8x8xf32>
    %62 = vector.extract_strided_slice %10 {offsets = [0, 0, 24], sizes = [2, 8, 8], strides = [1, 1, 1]} : vector<2x8x32xf32> to vector<2x8x8xf32>
    %63 = vector.extract_strided_slice %12 {offsets = [0, 0, 24], sizes = [2, 8, 8], strides = [1, 1, 1]} : vector<2x8x32xf32> to vector<2x8x8xf32>
    "tpu.trace_start"() <{level = 10 : i32, message = "bqd,bkd->bqk"}> : () -> ()
    %cst_27 = arith.constant dense<0.000000e+00> : vector<2x8x8xf32>
    %64 = tpu.matmul %61, %62, %cst_27 {dimension_numbers = #tpu.dot_dimension_numbers<[2], [2], [1], [1], [0, 0, 0, 1, 1, 1], [0], [0]>} : vector<2x8x8xf32>, vector<2x8x8xf32>, vector<2x8x8xf32> -> vector<2x8x8xf32>
    "tpu.trace_stop"() : () -> ()
    %65 = arith.addf %64, %1 : vector<2x8x8xf32>
    %cst_28 = arith.constant dense<0xFF800000> : vector<2x8xf32>
    %66 = vector.multi_reduction <maximumf>, %65, %cst_28 [2] : vector<2x8x8xf32> to vector<2x8xf32>
    %67 = vector.shape_cast %66 : vector<2x8xf32> to vector<2x8x1xf32>
    %68 = vector.broadcast %67 : vector<2x8x1xf32> to vector<2x8x8xf32>
    %69 = arith.subf %65, %68 : vector<2x8x8xf32>
    %70 = math.exp %69 : vector<2x8x8xf32>
    %cst_29 = arith.constant dense<0.000000e+00> : vector<2x8xf32>
    %71 = vector.multi_reduction <add>, %70, %cst_29 [2] : vector<2x8x8xf32> to vector<2x8xf32>
    %72 = vector.shape_cast %71 : vector<2x8xf32> to vector<2x8x1xf32>
    %73 = vector.broadcast %72 : vector<2x8x1xf32> to vector<2x8x8xf32>
    %74 = arith.divf %70, %73 : vector<2x8x8xf32>
    "tpu.trace_start"() <{level = 10 : i32, message = "bqk,bkd->bqd"}> : () -> ()
    %cst_30 = arith.constant dense<0.000000e+00> : vector<2x8x8xf32>
    %75 = tpu.matmul %74, %63, %cst_30 {dimension_numbers = #tpu.dot_dimension_numbers<[2], [1], [1], [2], [0, 0, 0, 1, 1, 2], [0], [0]>} : vector<2x8x8xf32>, vector<2x8x8xf32>, vector<2x8x8xf32> -> vector<2x8x8xf32>
    "tpu.trace_stop"() : () -> ()
    %c0_31 = arith.constant 0 : index
    %c0_32 = arith.constant 0 : index
    %c24 = arith.constant 24 : index
    %76 = vector.load %arg15[%c0_31, %c0_32, %c24] : memref<2x8x32xf32, #tpu.memory_space<vmem>>, vector<2x8x8xf32>
    tpu.vector_store %arg15[%c0_31, %c0_32, %c24], %75 {strides = array<i32>} : memref<2x8x32xf32, #tpu.memory_space<vmem>>, vector<2x8x8xf32>,
    %c0_33 = arith.constant 0 : index
    %c0_34 = arith.constant 0 : index
    %c0_35 = arith.constant 0 : index
    %77 = vector.load %arg15[%c0_33, %c0_34, %c0_35] : memref<2x8x32xf32, #tpu.memory_space<vmem>>, vector<2x8x32xf32>
    %78 = vector.shape_cast %77 : vector<2x8x32xf32> to vector<16x32xf32>
    %c0_36 = arith.constant 0 : index
    %c0_37 = arith.constant 0 : index
    %79 = vector.load %arg4[%c0_36, %c0_37] : memref<32x32xf32, #tpu.memory_space<vmem>>, vector<32x32xf32>
    %cst_38 = arith.constant dense<0.000000e+00> : vector<16x32xf32>
    %80 = tpu.matmul %78, %79, %cst_38 {dimension_numbers = #tpu.dot_dimension_numbers<[1], [0], [0], [1], [0, 0, 1, 1], [], []>} : vector<16x32xf32>, vector<32x32xf32>, vector<16x32xf32> -> vector<16x32xf32>
    %c0_39 = arith.constant 0 : index
    %c0_40 = arith.constant 0 : index
    %81 = vector.load %arg5[%c0_39, %c0_40] : memref<1x32xf32, #tpu.memory_space<vmem>>, vector<1x32xf32>
    %82 = vector.broadcast %81 : vector<1x32xf32> to vector<16x32xf32>
    %83 = arith.addf %80, %82 : vector<16x32xf32>
    %84 = arith.addf %83, %0 : vector<16x32xf32>
    %c0_41 = arith.constant 0 : index
    %c0_42 = arith.constant 0 : index
    %85 = vector.load %arg6[%c0_41, %c0_42] : memref<1x32xf32, #tpu.memory_space<vmem>>, vector<1x32xf32>
    %c0_43 = arith.constant 0 : index
    %c0_44 = arith.constant 0 : index
    %86 = vector.load %arg7[%c0_43, %c0_44] : memref<1x32xf32, #tpu.memory_space<vmem>>, vector<1x32xf32>
    %cst_45 = arith.constant dense<0.000000e+00> : vector<16xf32>
    %87 = vector.multi_reduction <add>, %84, %cst_45 [1] : vector<16x32xf32> to vector<16xf32>
    %88 = vector.shape_cast %87 : vector<16xf32> to vector<16x1xf32>
    %cst_46 = arith.constant 3.200000e+01 : f32
    %89 = vector.broadcast %cst_46 : f32 to vector<16x1xf32>
    %90 = arith.divf %88, %89 : vector<16x1xf32>
    %91 = vector.broadcast %90 : vector<16x1xf32> to vector<16x32xf32>
    %92 = arith.subf %84, %91 : vector<16x32xf32>
    %93 = arith.mulf %92, %92 : vector<16x32xf32>
    %cst_47 = arith.constant dense<0.000000e+00> : vector<16xf32>
    %94 = vector.multi_reduction <add>, %93, %cst_47 [1] : vector<16x32xf32> to vector<16xf32>
    %95 = vector.shape_cast %94 : vector<16xf32> to vector<16x1xf32>
    %cst_48 = arith.constant 3.200000e+01 : f32
    %96 = vector.broadcast %cst_48 : f32 to vector<16x1xf32>
    %97 = arith.divf %95, %96 : vector<16x1xf32>
    %cst_49 = arith.constant 9.99999996E-13 : f32
    %98 = vector.broadcast %cst_49 : f32 to vector<16x1xf32>
    %99 = arith.addf %97, %98 : vector<16x1xf32>
    %100 = math.rsqrt %99 : vector<16x1xf32>
    %101 = vector.broadcast %100 : vector<16x1xf32> to vector<16x32xf32>
    %102 = arith.mulf %92, %101 : vector<16x32xf32>
    %103 = vector.broadcast %85 : vector<1x32xf32> to vector<16x32xf32>
    %104 = arith.mulf %103, %102 : vector<16x32xf32>
    %105 = vector.broadcast %86 : vector<1x32xf32> to vector<16x32xf32>
    %106 = arith.addf %104, %105 : vector<16x32xf32>
    %c0_50 = arith.constant 0 : index
    %c0_51 = arith.constant 0 : index
    %107 = vector.load %arg8[%c0_50, %c0_51] : memref<32x64xf32, #tpu.memory_space<vmem>>, vector<32x64xf32>
    %cst_52 = arith.constant dense<0.000000e+00> : vector<16x64xf32>
    %108 = tpu.matmul %106, %107, %cst_52 {dimension_numbers = #tpu.dot_dimension_numbers<[1], [0], [0], [1], [0, 0, 1, 1], [], []>} : vector<16x32xf32>, vector<32x64xf32>, vector<16x64xf32> -> vector<16x64xf32>
    %c0_53 = arith.constant 0 : index
    %c0_54 = arith.constant 0 : index
    %109 = vector.load %arg9[%c0_53, %c0_54] : memref<1x64xf32, #tpu.memory_space<vmem>>, vector<1x64xf32>
    %110 = vector.broadcast %109 : vector<1x64xf32> to vector<16x64xf32>
    %111 = arith.addf %108, %110 : vector<16x64xf32>
    %cst_55 = arith.constant 0.000000e+00 : f32
    %112 = vector.broadcast %cst_55 : f32 to vector<16x64xf32>
    %113 = arith.maximumf %111, %112 : vector<16x64xf32>
    %c0_56 = arith.constant 0 : index
    %c0_57 = arith.constant 0 : index
    %114 = vector.load %arg10[%c0_56, %c0_57] : memref<64x32xf32, #tpu.memory_space<vmem>>, vector<64x32xf32>
    %cst_58 = arith.constant dense<0.000000e+00> : vector<16x32xf32>
    %115 = tpu.matmul %113, %114, %cst_58 {dimension_numbers = #tpu.dot_dimension_numbers<[1], [0], [0], [1], [0, 0, 1, 1], [], []>} : vector<16x64xf32>, vector<64x32xf32>, vector<16x32xf32> -> vector<16x32xf32>
    %c0_59 = arith.constant 0 : index
    %c0_60 = arith.constant 0 : index
    %116 = vector.load %arg11[%c0_59, %c0_60] : memref<1x32xf32, #tpu.memory_space<vmem>>, vector<1x32xf32>
    %117 = vector.broadcast %116 : vector<1x32xf32> to vector<16x32xf32>
    %118 = arith.addf %115, %117 : vector<16x32xf32>
    %119 = arith.addf %118, %106 : vector<16x32xf32>
    %c0_61 = arith.constant 0 : index
    %c0_62 = arith.constant 0 : index
    %120 = vector.load %arg12[%c0_61, %c0_62] : memref<1x32xf32, #tpu.memory_space<vmem>>, vector<1x32xf32>
    %c0_63 = arith.constant 0 : index
    %c0_64 = arith.constant 0 : index
    %121 = vector.load %arg13[%c0_63, %c0_64] : memref<1x32xf32, #tpu.memory_space<vmem>>, vector<1x32xf32>
    %cst_65 = arith.constant dense<0.000000e+00> : vector<16xf32>
    %122 = vector.multi_reduction <add>, %119, %cst_65 [1] : vector<16x32xf32> to vector<16xf32>
    %123 = vector.shape_cast %122 : vector<16xf32> to vector<16x1xf32>
    %cst_66 = arith.constant 3.200000e+01 : f32
    %124 = vector.broadcast %cst_66 : f32 to vector<16x1xf32>
    %125 = arith.divf %123, %124 : vector<16x1xf32>
    %126 = vector.broadcast %125 : vector<16x1xf32> to vector<16x32xf32>
    %127 = arith.subf %119, %126 : vector<16x32xf32>
    %128 = arith.mulf %127, %127 : vector<16x32xf32>
    %cst_67 = arith.constant dense<0.000000e+00> : vector<16xf32>
    %129 = vector.multi_reduction <add>, %128, %cst_67 [1] : vector<16x32xf32> to vector<16xf32>
    %130 = vector.shape_cast %129 : vector<16xf32> to vector<16x1xf32>
    %cst_68 = arith.constant 3.200000e+01 : f32
    %131 = vector.broadcast %cst_68 : f32 to vector<16x1xf32>
    %132 = arith.divf %130, %131 : vector<16x1xf32>
    %cst_69 = arith.constant 9.99999996E-13 : f32
    %133 = vector.broadcast %cst_69 : f32 to vector<16x1xf32>
    %134 = arith.addf %132, %133 : vector<16x1xf32>
    %135 = math.rsqrt %134 : vector<16x1xf32>
    %136 = vector.broadcast %135 : vector<16x1xf32> to vector<16x32xf32>
    %137 = arith.mulf %127, %136 : vector<16x32xf32>
    %138 = vector.broadcast %120 : vector<1x32xf32> to vector<16x32xf32>
    %139 = arith.mulf %138, %137 : vector<16x32xf32>
    %140 = vector.broadcast %121 : vector<1x32xf32> to vector<16x32xf32>
    %141 = arith.addf %139, %140 : vector<16x32xf32>
    %c0_70 = arith.constant 0 : index
    %c0_71 = arith.constant 0 : index
    %142 = vector.load %arg14[%c0_70, %c0_71] : memref<16x32xf32, #tpu.memory_space<vmem>>, vector<16x32xf32>
    tpu.vector_store %arg14[%c0_70, %c0_71], %141 {strides = array<i32>} : memref<16x32xf32, #tpu.memory_space<vmem>>, vector<16x32xf32>,
    return
  }
}

</mosaic_0001>

<llo_original>
// kernel: encoder_forward.1
$region0: #{encoder_forward.1}
  #allocation0 [shape = 'u32[]', space=smem, size = 0x4, offset = 0x4, fixed_abs, tag = 'smem constant byte address 0x4 - core index']
  #allocation1 [shape = 'u32[72,128]{1,0:T(1,128)}', space=vmem, size = 0x9000, scoped, tag = 'internal scratch']
  #allocation2 [shape = 'f32[2,8,32]{2,1,0:T(8,128)}', space=vmem, size = 0x2000, scoped, tag = 'scratch operand']
  %s0 = inlined_call_operand.vmem [shape: f32[16,32], index: 0, kind: input, shape index: {}]
  %s1 = inlined_call_operand.vmem [shape: f32[2,8,8], index: 1, kind: input, shape index: {}]
  %s2 = inlined_call_operand.vmem [shape: f32[32,96], index: 2, kind: input, shape index: {}]
  %s3 = inlined_call_operand.vmem [shape: f32[1,96], index: 3, kind: input, shape index: {}]
  %s4 = inlined_call_operand.vmem [shape: f32[32,32], index: 4, kind: input, shape index: {}]
  %s5 = inlined_call_operand.vmem [shape: f32[1,32], index: 5, kind: input, shape index: {}]
  %s6 = inlined_call_operand.vmem [shape: f32[1,32], index: 6, kind: input, shape index: {}]
  %s7 = inlined_call_operand.vmem [shape: f32[1,32], index: 7, kind: input, shape index: {}]
  %s8 = inlined_call_operand.vmem [shape: f32[32,64], index: 8, kind: input, shape index: {}]
  %s9 = inlined_call_operand.vmem [shape: f32[1,64], index: 9, kind: input, shape index: {}]
  %s10 = inlined_call_operand.vmem [shape: f32[64,32], index: 10, kind: input, shape index: {}]
  %s11 = inlined_call_operand.vmem [shape: f32[1,32], index: 11, kind: input, shape index: {}]
  %s12 = inlined_call_operand.vmem [shape: f32[1,32], index: 12, kind: input, shape index: {}]
  %s13 = inlined_call_operand.vmem [shape: f32[1,32], index: 13, kind: input, shape index: {}]
  %s14 = inlined_call_operand.hbm [shape: f32[16,32], index: 14, kind: output, shape index: {}]
  %s15 = sld [smem:[#allocation0]]
  $region66: #{encoder_forward.1} parent=0
    _
  %s17 = ssub.s32 1, %s15
  %s18 = scalar_select 0, %s17, %s15
  $region1: #{encoder_forward.1} parent=0
    #allocation3 [shape = 'u8[8192]{0}', space=vmem, size = 0x2000, scoped, tag = 'output window, operand 0, single buffered']
    #allocation4 [shape = 's32[1]{0}', space=sflag, size = 0x4, scoped, tag = 'scoped memory for encoder_forward.1']
    %19 = vsyncpa [#allocation4], 0
    // Predicated region
    $region2: #{encoder_forward.1} parent=1 // pred_check
      _
    $region3: #{encoder_forward.1} parent=1 // pred_check_branch
      %21 = sbr.rel (0) target = $region5
    $region4: #{encoder_forward.1} parent=1 // pred_region
      _
    $region5: #{encoder_forward.1} parent=1 // pred_fallthru
      _
    // Predicated region
    $region6: #{encoder_forward.1} parent=1 // pred_check
      _
    $region7: #{encoder_forward.1} parent=1 // pred_check_branch
      %23 = sbr.rel (0) target = $region9
    $region8: #{encoder_forward.1} parent=1 // pred_region
      _
    $region9: #{encoder_forward.1} parent=1 // pred_fallthru
      _
    // Predicated region
    $region10: #{encoder_forward.1} parent=1 // pred_check
      _
    $region11: #{encoder_forward.1} parent=1 // pred_check_branch
      %25 = sbr.rel (0) target = $region13
    $region12: #{encoder_forward.1} parent=1 // pred_region
      _
    $region13: #{encoder_forward.1} parent=1 // pred_fallthru
      _
    // Predicated region
    $region14: #{encoder_forward.1} parent=1 // pred_check
      _
    $region15: #{encoder_forward.1} parent=1 // pred_check_branch
      %27 = sbr.rel (0) target = $region17
    $region16: #{encoder_forward.1} parent=1 // pred_region
      _
    $region17: #{encoder_forward.1} parent=1 // pred_fallthru
      _
    // Predicated region
    $region18: #{encoder_forward.1} parent=1 // pred_check
      _
    $region19: #{encoder_forward.1} parent=1 // pred_check_branch
      %29 = sbr.rel (0) target = $region21
    $region20: #{encoder_forward.1} parent=1 // pred_region
      _
    $region21: #{encoder_forward.1} parent=1 // pred_fallthru
      _
    // Predicated region
    $region22: #{encoder_forward.1} parent=1 // pred_check
      _
    $region23: #{encoder_forward.1} parent=1 // pred_check_branch
      %31 = sbr.rel (0) target = $region25
    $region24: #{encoder_forward.1} parent=1 // pred_region
      _
    $region25: #{encoder_forward.1} parent=1 // pred_fallthru
      _
    // Predicated region
    $region26: #{encoder_forward.1} parent=1 // pred_check
      _
    $region27: #{encoder_forward.1} parent=1 // pred_check_branch
      %33 = sbr.rel (0) target = $region29
    $region28: #{encoder_forward.1} parent=1 // pred_region
      _
    $region29: #{encoder_forward.1} parent=1 // pred_fallthru
      _
    // Predicated region
    $region30: #{encoder_forward.1} parent=1 // pred_check
      _
    $region31: #{encoder_forward.1} parent=1 // pred_check_branch
      %35 = sbr.rel (0) target = $region33
    $region32: #{encoder_forward.1} parent=1 // pred_region
      _
    $region33: #{encoder_forward.1} parent=1 // pred_fallthru
      _
    // Predicated region
    $region34: #{encoder_forward.1} parent=1 // pred_check
      _
    $region35: #{encoder_forward.1} parent=1 // pred_check_branch
      %37 = sbr.rel (0) target = $region37
    $region36: #{encoder_forward.1} parent=1 // pred_region
      _
    $region37: #{encoder_forward.1} parent=1 // pred_fallthru
      _
    // Predicated region
    $region38: #{encoder_forward.1} parent=1 // pred_check
      _
    $region39: #{encoder_forward.1} parent=1 // pred_check_branch
      %39 = sbr.rel (0) target = $region41
    $region40: #{encoder_forward.1} parent=1 // pred_region
      _
    $region41: #{encoder_forward.1} parent=1 // pred_fallthru
      _
    // Predicated region
    $region42: #{encoder_forward.1} parent=1 // pred_check
      _
    $region43: #{encoder_forward.1} parent=1 // pred_check_branch
      %41 = sbr.rel (0) target = $region45
    $region44: #{encoder_forward.1} parent=1 // pred_region
      _
    $region45: #{encoder_forward.1} parent=1 // pred_fallthru
      _
    // Predicated region
    $region46: #{encoder_forward.1} parent=1 // pred_check
      _
    $region47: #{encoder_forward.1} parent=1 // pred_check_branch
      %43 = sbr.rel (0) target = $region49
    $region48: #{encoder_forward.1} parent=1 // pred_region
      _
    $region49: #{encoder_forward.1} parent=1 // pred_fallthru
      _
    // Predicated region
    $region50: #{encoder_forward.1} parent=1 // pred_check
      _
    $region51: #{encoder_forward.1} parent=1 // pred_check_branch
      %45 = sbr.rel (0) target = $region53
    $region52: #{encoder_forward.1} parent=1 // pred_region
      _
    $region53: #{encoder_forward.1} parent=1 // pred_fallthru
      _
    // Predicated region
    $region54: #{encoder_forward.1} parent=1 // pred_check
      _
    $region55: #{encoder_forward.1} parent=1 // pred_check_branch
      %47 = sbr.rel (0) target = $region57
    $region56: #{encoder_forward.1} parent=1 // pred_region
      _
    $region57: #{encoder_forward.1} parent=1 // pred_fallthru
      _
    %v48 = vld [vmem:[%s0] sm:$0xff]
    %v49 = vld [vmem:[%s0 + $0x8] sm:$0xff]
    %v50 = vld [vmem:[%s1] sm:$0xff]
    %v51 = vld [vmem:[%s1 + $0x8] sm:$0xff]
    %v52 = vld [vmem:[%s2] sm:$0xff]
    %v53 = vld [vmem:[%s2 + $0x8] sm:$0xff]
    %v54 = vld [vmem:[%s2 + $0x10] sm:$0xff]
    %v55 = vld [vmem:[%s2 + $0x18] sm:$0xff]
    %v56 = vld [vmem:[%s3] sm:$0x1]
    %v58 = vperm.slane %v56, 0
    %vm60 = vcmask 261120
    %v62 = vsel %vm60, %v48, 0
    %v65 = vsel %vm60, %v49, 0
    %67 = vmatpush.msra.mxu0 0.0
    %68 = vmatpush.msra.mxu0 0.0
    %69 = vmatpush.msra.mxu0 0.0
    %70 = vmatpush.msra.mxu0 0.0
    %71 = vmatpush.msra.mxu0 0.0
    %72 = vmatpush.msra.mxu0 0.0
    %73 = vmatpush.msra.mxu0 0.0
    %74 = vmatpush.msra.mxu0 0.0
    %75 = vmatpush.msra.mxu0 0.0
    %76 = vmatpush.msra.mxu0 0.0
    %77 = vmatpush.msra.mxu0 0.0
    %78 = vmatpush.msra.mxu0 0.0
    %79 = vmatpush.msra.mxu0 %v55
    %80 = vmatpush.msra.mxu0 %v54
    %81 = vmatpush.msra.mxu0 %v53
    %82 = vmatpush.msra.mxu0 %v52
    %83 = vmatmul.f32.gmra.mxu0 %v62
    %v84 = vpop.f32.mrf.mxu0
    %v85 = vadd.f32 %v58, %v84
    %86 = vmatmul.f32.gmra.mxu0 %v65
    %v87 = vpop.f32.mrf.mxu0
    %v88 = vadd.f32 %v58, %v87
    %89 = vdwg.mxu0
    %91 = vrot.lane.b32.xlu0 %v85, 96
    %v92 = vpop.permute.xlu0 %91
    %vm93 = vcmask 64512
    %v94 = vsel %vm93, %v85, 0
    %v96 = vsel %vm93, %v92, 0
    %98 = vmatpush.xpose.msra.mxu0 0.0
    %99 = vmatpush.xpose.msra.mxu0 0.0
    %100 = vmatpush.xpose.msra.mxu0 0.0
    %101 = vmatpush.xpose.msra.mxu0 0.0
    %102 = vmatpush.xpose.msra.mxu0 0.0
    %103 = vmatpush.xpose.msra.mxu0 0.0
    %104 = vmatpush.xpose.msra.mxu0 0.0
    %105 = vmatpush.xpose.msra.mxu0 0.0
    %106 = vmatpush.xpose.msra.mxu0 0.0
    %107 = vmatpush.xpose.msra.mxu0 0.0
    %108 = vmatpush.xpose.msra.mxu0 0.0
    %109 = vmatpush.xpose.msra.mxu0 0.0
    %110 = vmatpush.xpose.msra.mxu0 0.0
    %111 = vmatpush.xpose.msra.mxu0 0.0
    %112 = vmatpush.xpose.msra.mxu0 0.0
    %113 = vmatpush.xpose.msra.mxu0 %v96
    %114 = vmatmul.f32.gmra.mxu0 %v94
    %v115 = vpop.f32.mrf.mxu0
    %v116 = vadd.f32 %v50, %v115
    %117 = vdwg.mxu0
    %119 = vrot.lane.b32.xlu0 %v88, 96
    %v120 = vpop.permute.xlu0 %119
    %v121 = vsel %vm93, %v88, 0
    %v123 = vsel %vm93, %v120, 0
    %125 = vmatpush.xpose.msra.mxu0 0.0
    %126 = vmatpush.xpose.msra.mxu0 0.0
    %127 = vmatpush.xpose.msra.mxu0 0.0
    %128 = vmatpush.xpose.msra.mxu0 0.0
    %129 = vmatpush.xpose.msra.mxu0 0.0
    %130 = vmatpush.xpose.msra.mxu0 0.0
    %131 = vmatpush.xpose.msra.mxu0 0.0
    %132 = vmatpush.xpose.msra.mxu0 0.0
    %133 = vmatpush.xpose.msra.mxu0 0.0
    %134 = vmatpush.xpose.msra.mxu0 0.0
    %135 = vmatpush.xpose.msra.mxu0 0.0
    %136 = vmatpush.xpose.msra.mxu0 0.0
    %137 = vmatpush.xpose.msra.mxu0 0.0
    %138 = vmatpush.xpose.msra.mxu0 0.0
    %139 = vmatpush.xpose.msra.mxu0 0.0
    %140 = vmatpush.xpose.msra.mxu0 %v123
    %141 = vmatmul.f32.gmra.mxu0 %v121
    %v142 = vpop.f32.mrf.mxu0
    %v143 = vadd.f32 %v51, %v142
    %144 = vdwg.mxu0
    %v145 = vsel %vm93, %v116, -inf
    %146 = vmax.xlane.f32.xlu0 %v145
    %v147 = vpop.xlane.xlu0 %146
    %v148 = vsel %vm93, %v143, -inf
    %149 = vmax.xlane.f32.xlu0 %v148
    %v150 = vpop.xlane.xlu0 %149
    %v151 = vsub.f32 %v116, %v147
    %v152 = vsub.f32 %v143, %v150
    %v153 = vmul.f32 %v151, 1.442695
    %v154 = vpow.pop %v153
    %v155 = vmul.f32 %v152, 1.442695
    %v156 = vpow.pop %v155
    %v157 = vsel %vm93, %v154, 0.0
    %158 = vadd.xlane.f32.xlu0 %v157
    %v159 = vpop.xlane.xlu0 %158
    %v160 = vsel %vm93, %v156, 0.0
    %161 = vadd.xlane.f32.xlu0 %v160
    %v162 = vpop.xlane.xlu0 %161
    %v163 = vrcp.pop %v159
    %v164 = vmul.f32 %v159, %v163
    %v165 = vsub.f32 1.0, %v164
    %v166 = vmul.f32 %v163, %v165
    %v167 = vadd.f32 %v163, %v166
    %vm168 = vweird.f32 %v159
    %vm169 = vweird.f32 %v163
    %vm170 = vmor %vm168, %vm169
    %v171 = vsel %vm170, %v163, %v167
    %v172 = vand.u32 2147483647, %v159
    %vm173 = vcmp.eq.f32.partialorder %v172, 8.507059e+37
    %v174 = vand.u32 %v159, 2147483648
    %v175 = vor.u32 1.1754944e-38, %v174
    %v176 = vsel %vm173, %v175, %v171
    %v177 = vmul.f32 %v154, %v176
    %v178 = vrcp.pop %v162
    %v179 = vmul.f32 %v162, %v178
    %v180 = vsub.f32 1.0, %v179
    %v181 = vmul.f32 %v178, %v180
    %v182 = vadd.f32 %v178, %v181
    %vm183 = vweird.f32 %v162
    %vm184 = vweird.f32 %v178
    %vm185 = vmor %vm183, %vm184
    %v186 = vsel %vm185, %v178, %v182
    %v187 = vand.u32 2147483647, %v162
    %vm188 = vcmp.eq.f32.partialorder %v187, 8.507059e+37
    %v189 = vand.u32 %v162, 2147483648
    %v190 = vor.u32 1.1754944e-38, %v189
    %v191 = vsel %vm188, %v190, %v186
    %v192 = vmul.f32 %v156, %v191
    %193 = vrot.lane.b32.xlu0 %v85, 64
    %v194 = vpop.permute.xlu0 %193
    %v197 = vsel %vm93, %v177, 0
    %199 = vmatpush.msra.mxu0 0.0
    %200 = vmatpush.msra.mxu0 0.0
    %201 = vmatpush.msra.mxu0 0.0
    %202 = vmatpush.msra.mxu0 0.0
    %203 = vmatpush.msra.mxu0 0.0
    %204 = vmatpush.msra.mxu0 0.0
    %205 = vmatpush.msra.mxu0 0.0
    %206 = vmatpush.msra.mxu0 0.0
    %207 = vmatpush.msra.mxu0 0.0
    %208 = vmatpush.msra.mxu0 0.0
    %209 = vmatpush.msra.mxu0 0.0
    %210 = vmatpush.msra.mxu0 0.0
    %211 = vmatpush.msra.mxu0 0.0
    %212 = vmatpush.msra.mxu0 0.0
    %213 = vmatpush.msra.mxu0 0.0
    %214 = vmatpush.msra.mxu0 %v194
    %215 = vmatmul.f32.gmra.mxu0 %v197
    %v216 = vpop.f32.mrf.mxu0
    %v217 = vadd.f32 0.0, %v216
    %218 = vdwg.mxu0
    %219 = vrot.lane.b32.xlu0 %v88, 64
    %v220 = vpop.permute.xlu0 %219
    %v223 = vsel %vm93, %v192, 0
    %225 = vmatpush.msra.mxu0 0.0
    %226 = vmatpush.msra.mxu0 0.0
    %227 = vmatpush.msra.mxu0 0.0
    %228 = vmatpush.msra.mxu0 0.0
    %229 = vmatpush.msra.mxu0 0.0
    %230 = vmatpush.msra.mxu0 0.0
    %231 = vmatpush.msra.mxu0 0.0
    %232 = vmatpush.msra.mxu0 0.0
    %233 = vmatpush.msra.mxu0 0.0
    %234 = vmatpush.msra.mxu0 0.0
    %235 = vmatpush.msra.mxu0 0.0
    %236 = vmatpush.msra.mxu0 0.0
    %237 = vmatpush.msra.mxu0 0.0
    %238 = vmatpush.msra.mxu0 0.0
    %239 = vmatpush.msra.mxu0 0.0
    %240 = vmatpush.msra.mxu0 %v220
    %241 = vmatmul.f32.gmra.mxu0 %v223
    %v242 = vpop.f32.mrf.mxu0
    %v243 = vadd.f32 0.0, %v242
    %244 = vdwg.mxu0
    %245 = vst.msk [vmem:[#allocation2] sm:$0xff] %vm93, %v217
    %246 = vst.msk [vmem:[#allocation2 + $0x8] sm:$0xff] %vm93, %v243
    %247 = vrot.lane.b32.xlu0 %v85, 120
    %v248 = vpop.permute.xlu0 %247
    %249 = vrot.lane.b32.xlu0 %v85, 88
    %v250 = vpop.permute.xlu0 %249
    %v251 = vsel %vm93, %v248, 0
    %v253 = vsel %vm93, %v250, 0
    %255 = vmatpush.xpose.msra.mxu0 0.0
    %256 = vmatpush.xpose.msra.mxu0 0.0
    %257 = vmatpush.xpose.msra.mxu0 0.0
    %258 = vmatpush.xpose.msra.mxu0 0.0
    %259 = vmatpush.xpose.msra.mxu0 0.0
    %260 = vmatpush.xpose.msra.mxu0 0.0
    %261 = vmatpush.xpose.msra.mxu0 0.0
    %262 = vmatpush.xpose.msra.mxu0 0.0
    %263 = vmatpush.xpose.msra.mxu0 0.0
    %264 = vmatpush.xpose.msra.mxu0 0.0
    %265 = vmatpush.xpose.msra.mxu0 0.0
    %266 = vmatpush.xpose.msra.mxu0 0.0
    %267 = vmatpush.xpose.msra.mxu0 0.0
    %268 = vmatpush.xpose.msra.mxu0 0.0
    %269 = vmatpush.xpose.msra.mxu0 0.0
    %270 = vmatpush.xpose.msra.mxu0 %v253
    %271 = vmatmul.f32.gmra.mxu0 %v251
    %v272 = vpop.f32.mrf.mxu0
    %v273 = vadd.f32 %v50, %v272
    %274 = vdwg.mxu0
    %275 = vrot.lane.b32.xlu0 %v88, 120
    %v276 = vpop.permute.xlu0 %275
    %277 = vrot.lane.b32.xlu0 %v88, 88
    %v278 = vpop.permute.xlu0 %277
    %v279 = vsel %vm93, %v276, 0
    %v281 = vsel %vm93, %v278, 0
    %283 = vmatpush.xpose.msra.mxu0 0.0
    %284 = vmatpush.xpose.msra.mxu0 0.0
    %285 = vmatpush.xpose.msra.mxu0 0.0
    %286 = vmatpush.xpose.msra.mxu0 0.0
    %287 = vmatpush.xpose.msra.mxu0 0.0
    %288 = vmatpush.xpose.msra.mxu0 0.0
    %289 = vmatpush.xpose.msra.mxu0 0.0
    %290 = vmatpush.xpose.msra.mxu0 0.0
    %291 = vmatpush.xpose.msra.mxu0 0.0
    %292 = vmatpush.xpose.msra.mxu0 0.0
    %293 = vmatpush.xpose.msra.mxu0 0.0
    %294 = vmatpush.xpose.msra.mxu0 0.0
    %295 = vmatpush.xpose.msra.mxu0 0.0
    %296 = vmatpush.xpose.msra.mxu0 0.0
    %297 = vmatpush.xpose.msra.mxu0 0.0
    %298 = vmatpush.xpose.msra.mxu0 %v281
    %299 = vmatmul.f32.gmra.mxu0 %v279
    %v300 = vpop.f32.mrf.mxu0
    %v301 = vadd.f32 %v51, %v300
    %302 = vdwg.mxu0
    %v303 = vsel %vm93, %v273, -inf
    %304 = vmax.xlane.f32.xlu0 %v303
    %v305 = vpop.xlane.xlu0 %304
    %v306 = vsel %vm93, %v301, -inf
    %307 = vmax.xlane.f32.xlu0 %v306
    %v308 = vpop.xlane.xlu0 %307
    %v309 = vsub.f32 %v273, %v305
    %v310 = vsub.f32 %v301, %v308
    %v311 = vmul.f32 %v309, 1.442695
    %v312 = vpow.pop %v311
    %v313 = vmul.f32 %v310, 1.442695
    %v314 = vpow.pop %v313
    %v315 = vsel %vm93, %v312, 0.0
    %316 = vadd.xlane.f32.xlu0 %v315
    %v317 = vpop.xlane.xlu0 %316
    %v318 = vsel %vm93, %v314, 0.0
    %319 = vadd.xlane.f32.xlu0 %v318
    %v320 = vpop.xlane.xlu0 %319
    %v321 = vrcp.pop %v317
    %v322 = vmul.f32 %v317, %v321
    %v323 = vsub.f32 1.0, %v322
    %v324 = vmul.f32 %v321, %v323
    %v325 = vadd.f32 %v321, %v324
    %vm326 = vweird.f32 %v317
    %vm327 = vweird.f32 %v321
    %vm328 = vmor %vm326, %vm327
    %v329 = vsel %vm328, %v321, %v325
    %v330 = vand.u32 2147483647, %v317
    %vm331 = vcmp.eq.f32.partialorder %v330, 8.507059e+37
    %v332 = vand.u32 %v317, 2147483648
    %v333 = vor.u32 1.1754944e-38, %v332
    %v334 = vsel %vm331, %v333, %v329
    %v335 = vmul.f32 %v312, %v334
    %v336 = vrcp.pop %v320
    %v337 = vmul.f32 %v320, %v336
    %v338 = vsub.f32 1.0, %v337
    %v339 = vmul.f32 %v336, %v338
    %v340 = vadd.f32 %v336, %v339
    %vm341 = vweird.f32 %v320
    %vm342 = vweird.f32 %v336
    %vm343 = vmor %vm341, %vm342
    %v344 = vsel %vm343, %v336, %v340
    %v345 = vand.u32 2147483647, %v320
    %vm346 = vcmp.eq.f32.partialorder %v345, 8.507059e+37
    %v347 = vand.u32 %v320, 2147483648
    %v348 = vor.u32 1.1754944e-38, %v347
    %v349 = vsel %vm346, %v348, %v344
    %v350 = vmul.f32 %v314, %v349
    %351 = vrot.lane.b32.xlu0 %v85, 56
    %v352 = vpop.permute.xlu0 %351
    %v355 = vsel %vm93, %v335, 0
    %357 = vmatpush.msra.mxu0 0.0
    %358 = vmatpush.msra.mxu0 0.0
    %359 = vmatpush.msra.mxu0 0.0
    %360 = vmatpush.msra.mxu0 0.0
    %361 = vmatpush.msra.mxu0 0.0
    %362 = vmatpush.msra.mxu0 0.0
    %363 = vmatpush.msra.mxu0 0.0
    %364 = vmatpush.msra.mxu0 0.0
    %365 = vmatpush.msra.mxu0 0.0
    %366 = vmatpush.msra.mxu0 0.0
    %367 = vmatpush.msra.mxu0 0.0
    %368 = vmatpush.msra.mxu0 0.0
    %369 = vmatpush.msra.mxu0 0.0
    %370 = vmatpush.msra.mxu0 0.0
    %371 = vmatpush.msra.mxu0 0.0
    %372 = vmatpush.msra.mxu0 %v352
    %373 = vmatmul.f32.gmra.mxu0 %v355
    %v374 = vpop.f32.mrf.mxu0
    %v375 = vadd.f32 0.0, %v374
    %376 = vdwg.mxu0
    %377 = vrot.lane.b32.xlu0 %v88, 56
    %v378 = vpop.permute.xlu0 %377
    %v381 = vsel %vm93, %v350, 0
    %383 = vmatpush.msra.mxu0 0.0
    %384 = vmatpush.msra.mxu0 0.0
    %385 = vmatpush.msra.mxu0 0.0
    %386 = vmatpush.msra.mxu0 0.0
    %387 = vmatpush.msra.mxu0 0.0
    %388 = vmatpush.msra.mxu0 0.0
    %389 = vmatpush.msra.mxu0 0.0
    %390 = vmatpush.msra.mxu0 0.0
    %391 = vmatpush.msra.mxu0 0.0
    %392 = vmatpush.msra.mxu0 0.0
    %393 = vmatpush.msra.mxu0 0.0
    %394 = vmatpush.msra.mxu0 0.0
    %395 = vmatpush.msra.mxu0 0.0
    %396 = vmatpush.msra.mxu0 0.0
    %397 = vmatpush.msra.mxu0 0.0
    %398 = vmatpush.msra.mxu0 %v378
    %399 = vmatmul.f32.gmra.mxu0 %v381
    %v400 = vpop.f32.mrf.mxu0
    %v401 = vadd.f32 0.0, %v400
    %402 = vdwg.mxu0
    %405 = vrot.lane.b32.xlu0 %v375, 8
    %v406 = vpop.permute.xlu0 %405
    %407 = vrot.lane.b32.xlu0 %v401, 8
    %v408 = vpop.permute.xlu0 %407
    %vm411 = vcmask 130112
    %412 = vst.msk [vmem:[#allocation2] sm:$0xff] %vm411, %v406
    %413 = vst.msk [vmem:[#allocation2 + $0x8] sm:$0xff] %vm411, %v408
    %414 = vrot.lane.b32.xlu0 %v85, 112
    %v415 = vpop.permute.xlu0 %414
    %416 = vrot.lane.b32.xlu0 %v85, 80
    %v417 = vpop.permute.xlu0 %416
    %v418 = vsel %vm93, %v415, 0
    %v420 = vsel %vm93, %v417, 0
    %422 = vmatpush.xpose.msra.mxu0 0.0
    %423 = vmatpush.xpose.msra.mxu0 0.0
    %424 = vmatpush.xpose.msra.mxu0 0.0
    %425 = vmatpush.xpose.msra.mxu0 0.0
    %426 = vmatpush.xpose.msra.mxu0 0.0
    %427 = vmatpush.xpose.msra.mxu0 0.0
    %428 = vmatpush.xpose.msra.mxu0 0.0
    %429 = vmatpush.xpose.msra.mxu0 0.0
    %430 = vmatpush.xpose.msra.mxu0 0.0
    %431 = vmatpush.xpose.msra.mxu0 0.0
    %432 = vmatpush.xpose.msra.mxu0 0.0
    %433 = vmatpush.xpose.msra.mxu0 0.0
    %434 = vmatpush.xpose.msra.mxu0 0.0
    %435 = vmatpush.xpose.msra.mxu0 0.0
    %436 = vmatpush.xpose.msra.mxu0 0.0
    %437 = vmatpush.xpose.msra.mxu0 %v420
    %438 = vmatmul.f32.gmra.mxu0 %v418
    %v439 = vpop.f32.mrf.mxu0
    %v440 = vadd.f32 %v50, %v439
    %441 = vdwg.mxu0
    %442 = vrot.lane.b32.xlu0 %v88, 112
    %v443 = vpop.permute.xlu0 %442
    %444 = vrot.lane.b32.xlu0 %v88, 80
    %v445 = vpop.permute.xlu0 %444
    %v446 = vsel %vm93, %v443, 0
    %v448 = vsel %vm93, %v445, 0
    %450 = vmatpush.xpose.msra.mxu0 0.0
    %451 = vmatpush.xpose.msra.mxu0 0.0
    %452 = vmatpush.xpose.msra.mxu0 0.0
    %453 = vmatpush.xpose.msra.mxu0 0.0
    %454 = vmatpush.xpose.msra.mxu0 0.0
    %455 = vmatpush.xpose.msra.mxu0 0.0
    %456 = vmatpush.xpose.msra.mxu0 0.0
    %457 = vmatpush.xpose.msra.mxu0 0.0
    %458 = vmatpush.xpose.msra.mxu0 0.0
    %459 = vmatpush.xpose.msra.mxu0 0.0
    %460 = vmatpush.xpose.msra.mxu0 0.0
    %461 = vmatpush.xpose.msra.mxu0 0.0
    %462 = vmatpush.xpose.msra.mxu0 0.0
    %463 = vmatpush.xpose.msra.mxu0 0.0
    %464 = vmatpush.xpose.msra.mxu0 0.0
    %465 = vmatpush.xpose.msra.mxu0 %v448
    %466 = vmatmul.f32.gmra.mxu0 %v446
    %v467 = vpop.f32.mrf.mxu0
    %v468 = vadd.f32 %v51, %v467
    %469 = vdwg.mxu0
    %v470 = vsel %vm93, %v440, -inf
    %471 = vmax.xlane.f32.xlu0 %v470
    %v472 = vpop.xlane.xlu0 %471
    %v473 = vsel %vm93, %v468, -inf
    %474 = vmax.xlane.f32.xlu0 %v473
    %v475 = vpop.xlane.xlu0 %474
    %v476 = vsub.f32 %v440, %v472
    %v477 = vsub.f32 %v468, %v475
    %v478 = vmul.f32 %v476, 1.442695
    %v479 = vpow.pop %v478
    %v480 = vmul.f32 %v477, 1.442695
    %v481 = vpow.pop %v480
    %v482 = vsel %vm93, %v479, 0.0
    %483 = vadd.xlane.f32.xlu0 %v482
    %v484 = vpop.xlane.xlu0 %483
    %v485 = vsel %vm93, %v481, 0.0
    %486 = vadd.xlane.f32.xlu0 %v485
    %v487 = vpop.xlane.xlu0 %486
    %v488 = vrcp.pop %v484
    %v489 = vmul.f32 %v484, %v488
    %v490 = vsub.f32 1.0, %v489
    %v491 = vmul.f32 %v488, %v490
    %v492 = vadd.f32 %v488, %v491
    %vm493 = vweird.f32 %v484
    %vm494 = vweird.f32 %v488
    %vm495 = vmor %vm493, %vm494
    %v496 = vsel %vm495, %v488, %v492
    %v497 = vand.u32 2147483647, %v484
    %vm498 = vcmp.eq.f32.partialorder %v497, 8.507059e+37
    %v499 = vand.u32 %v484, 2147483648
    %v500 = vor.u32 1.1754944e-38, %v499
    %v501 = vsel %vm498, %v500, %v496
    %v502 = vmul.f32 %v479, %v501
    %v503 = vrcp.pop %v487
    %v504 = vmul.f32 %v487, %v503
    %v505 = vsub.f32 1.0, %v504
    %v506 = vmul.f32 %v503, %v505
    %v507 = vadd.f32 %v503, %v506
    %vm508 = vweird.f32 %v487
    %vm509 = vweird.f32 %v503
    %vm510 = vmor %vm508, %vm509
    %v511 = vsel %vm510, %v503, %v507
    %v512 = vand.u32 2147483647, %v487
    %vm513 = vcmp.eq.f32.partialorder %v512, 8.507059e+37
    %v514 = vand.u32 %v487, 2147483648
    %v515 = vor.u32 1.1754944e-38, %v514
    %v516 = vsel %vm513, %v515, %v511
    %v517 = vmul.f32 %v481, %v516
    %518 = vrot.lane.b32.xlu0 %v85, 48
    %v519 = vpop.permute.xlu0 %518
    %v522 = vsel %vm93, %v502, 0
    %524 = vmatpush.msra.mxu0 0.0
    %525 = vmatpush.msra.mxu0 0.0
    %526 = vmatpush.msra.mxu0 0.0
    %527 = vmatpush.msra.mxu0 0.0
    %528 = vmatpush.msra.mxu0 0.0
    %529 = vmatpush.msra.mxu0 0.0
    %530 = vmatpush.msra.mxu0 0.0
    %531 = vmatpush.msra.mxu0 0.0
    %532 = vmatpush.msra.mxu0 0.0
    %533 = vmatpush.msra.mxu0 0.0
    %534 = vmatpush.msra.mxu0 0.0
    %535 = vmatpush.msra.mxu0 0.0
    %536 = vmatpush.msra.mxu0 0.0
    %537 = vmatpush.msra.mxu0 0.0
    %538 = vmatpush.msra.mxu0 0.0
    %539 = vmatpush.msra.mxu0 %v519
    %540 = vmatmul.f32.gmra.mxu0 %v522
    %v541 = vpop.f32.mrf.mxu0
    %v542 = vadd.f32 0.0, %v541
    %543 = vdwg.mxu0
    %544 = vrot.lane.b32.xlu0 %v88, 48
    %v545 = vpop.permute.xlu0 %544
    %v548 = vsel %vm93, %v517, 0
    %550 = vmatpush.msra.mxu0 0.0
    %551 = vmatpush.msra.mxu0 0.0
    %552 = vmatpush.msra.mxu0 0.0
    %553 = vmatpush.msra.mxu0 0.0
    %554 = vmatpush.msra.mxu0 0.0
    %555 = vmatpush.msra.mxu0 0.0
    %556 = vmatpush.msra.mxu0 0.0
    %557 = vmatpush.msra.mxu0 0.0
    %558 = vmatpush.msra.mxu0 0.0
    %559 = vmatpush.msra.mxu0 0.0
    %560 = vmatpush.msra.mxu0 0.0
    %561 = vmatpush.msra.mxu0 0.0
    %562 = vmatpush.msra.mxu0 0.0
    %563 = vmatpush.msra.mxu0 0.0
    %564 = vmatpush.msra.mxu0 0.0
    %565 = vmatpush.msra.mxu0 %v545
    %566 = vmatmul.f32.gmra.mxu0 %v548
    %v567 = vpop.f32.mrf.mxu0
    %v568 = vadd.f32 0.0, %v567
    %569 = vdwg.mxu0
    %572 = vrot.lane.b32.xlu0 %v542, 16
    %v573 = vpop.permute.xlu0 %572
    %574 = vrot.lane.b32.xlu0 %v568, 16
    %v575 = vpop.permute.xlu0 %574
    %vm578 = vcmask 195712
    %579 = vst.msk [vmem:[#allocation2] sm:$0xff] %vm578, %v573
    %580 = vst.msk [vmem:[#allocation2 + $0x8] sm:$0xff] %vm578, %v575
    %581 = vrot.lane.b32.xlu0 %v85, 104
    %v582 = vpop.permute.xlu0 %581
    %583 = vrot.lane.b32.xlu0 %v85, 72
    %v584 = vpop.permute.xlu0 %583
    %v585 = vsel %vm93, %v582, 0
    %v587 = vsel %vm93, %v584, 0
    %589 = vmatpush.xpose.msra.mxu0 0.0
    %590 = vmatpush.xpose.msra.mxu0 0.0
    %591 = vmatpush.xpose.msra.mxu0 0.0
    %592 = vmatpush.xpose.msra.mxu0 0.0
    %593 = vmatpush.xpose.msra.mxu0 0.0
    %594 = vmatpush.xpose.msra.mxu0 0.0
    %595 = vmatpush.xpose.msra.mxu0 0.0
    %596 = vmatpush.xpose.msra.mxu0 0.0
    %597 = vmatpush.xpose.msra.mxu0 0.0
    %598 = vmatpush.xpose.msra.mxu0 0.0
    %599 = vmatpush.xpose.msra.mxu0 0.0
    %600 = vmatpush.xpose.msra.mxu0 0.0
    %601 = vmatpush.xpose.msra.mxu0 0.0
    %602 = vmatpush.xpose.msra.mxu0 0.0
    %603 = vmatpush.xpose.msra.mxu0 0.0
    %604 = vmatpush.xpose.msra.mxu0 %v587
    %605 = vmatmul.f32.gmra.mxu0 %v585
    %v606 = vpop.f32.mrf.mxu0
    %v607 = vadd.f32 %v50, %v606
    %608 = vdwg.mxu0
    %609 = vrot.lane.b32.xlu0 %v88, 104
    %v610 = vpop.permute.xlu0 %609
    %611 = vrot.lane.b32.xlu0 %v88, 72
    %v612 = vpop.permute.xlu0 %611
    %v613 = vsel %vm93, %v610, 0
    %v615 = vsel %vm93, %v612, 0
    %617 = vmatpush.xpose.msra.mxu0 0.0
    %618 = vmatpush.xpose.msra.mxu0 0.0
    %619 = vmatpush.xpose.msra.mxu0 0.0
    %620 = vmatpush.xpose.msra.mxu0 0.0
    %621 = vmatpush.xpose.msra.mxu0 0.0
    %622 = vmatpush.xpose.msra.mxu0 0.0
    %623 = vmatpush.xpose.msra.mxu0 0.0
    %624 = vmatpush.xpose.msra.mxu0 0.0
    %625 = vmatpush.xpose.msra.mxu0 0.0
    %626 = vmatpush.xpose.msra.mxu0 0.0
    %627 = vmatpush.xpose.msra.mxu0 0.0
    %628 = vmatpush.xpose.msra.mxu0 0.0
    %629 = vmatpush.xpose.msra.mxu0 0.0
    %630 = vmatpush.xpose.msra.mxu0 0.0
    %631 = vmatpush.xpose.msra.mxu0 0.0
    %632 = vmatpush.xpose.msra.mxu0 %v615
    %633 = vmatmul.f32.gmra.mxu0 %v613
    %v634 = vpop.f32.mrf.mxu0
    %v635 = vadd.f32 %v51, %v634
    %636 = vdwg.mxu0
    %v637 = vsel %vm93, %v607, -inf
    %638 = vmax.xlane.f32.xlu0 %v637
    %v639 = vpop.xlane.xlu0 %638
    %v640 = vsel %vm93, %v635, -inf
    %641 = vmax.xlane.f32.xlu0 %v640
    %v642 = vpop.xlane.xlu0 %641
    %v643 = vsub.f32 %v607, %v639
    %v644 = vsub.f32 %v635, %v642
    %v645 = vmul.f32 %v643, 1.442695
    %v646 = vpow.pop %v645
    %v647 = vmul.f32 %v644, 1.442695
    %v648 = vpow.pop %v647
    %v649 = vsel %vm93, %v646, 0.0
    %650 = vadd.xlane.f32.xlu0 %v649
    %v651 = vpop.xlane.xlu0 %650
    %v652 = vsel %vm93, %v648, 0.0
    %653 = vadd.xlane.f32.xlu0 %v652
    %v654 = vpop.xlane.xlu0 %653
    %v655 = vrcp.pop %v651
    %v656 = vmul.f32 %v651, %v655
    %v657 = vsub.f32 1.0, %v656
    %v658 = vmul.f32 %v655, %v657
    %v659 = vadd.f32 %v655, %v658
    %vm660 = vweird.f32 %v651
    %vm661 = vweird.f32 %v655
    %vm662 = vmor %vm660, %vm661
    %v663 = vsel %vm662, %v655, %v659
    %v664 = vand.u32 2147483647, %v651
    %vm665 = vcmp.eq.f32.partialorder %v664, 8.507059e+37
    %v666 = vand.u32 %v651, 2147483648
    %v667 = vor.u32 1.1754944e-38, %v666
    %v668 = vsel %vm665, %v667, %v663
    %v669 = vmul.f32 %v646, %v668
    %v670 = vrcp.pop %v654
    %v671 = vmul.f32 %v654, %v670
    %v672 = vsub.f32 1.0, %v671
    %v673 = vmul.f32 %v670, %v672
    %v674 = vadd.f32 %v670, %v673
    %vm675 = vweird.f32 %v654
    %vm676 = vweird.f32 %v670
    %vm677 = vmor %vm675, %vm676
    %v678 = vsel %vm677, %v670, %v674
    %v679 = vand.u32 2147483647, %v654
    %vm680 = vcmp.eq.f32.partialorder %v679, 8.507059e+37
    %v681 = vand.u32 %v654, 2147483648
    %v682 = vor.u32 1.1754944e-38, %v681
    %v683 = vsel %vm680, %v682, %v678
    %v684 = vmul.f32 %v648, %v683
    %685 = vrot.lane.b32.xlu0 %v85, 40
    %v686 = vpop.permute.xlu0 %685
    %v689 = vsel %vm93, %v669, 0
    %691 = vmatpush.msra.mxu0 0.0
    %692 = vmatpush.msra.mxu0 0.0
    %693 = vmatpush.msra.mxu0 0.0
    %694 = vmatpush.msra.mxu0 0.0
    %695 = vmatpush.msra.mxu0 0.0
    %696 = vmatpush.msra.mxu0 0.0
    %697 = vmatpush.msra.mxu0 0.0
    %698 = vmatpush.msra.mxu0 0.0
    %699 = vmatpush.msra.mxu0 0.0
    %700 = vmatpush.msra.mxu0 0.0
    %701 = vmatpush.msra.mxu0 0.0
    %702 = vmatpush.msra.mxu0 0.0
    %703 = vmatpush.msra.mxu0 0.0
    %704 = vmatpush.msra.mxu0 0.0
    %705 = vmatpush.msra.mxu0 0.0
    %706 = vmatpush.msra.mxu0 %v686
    %707 = vmatmul.f32.gmra.mxu0 %v689
    %v708 = vpop.f32.mrf.mxu0
    %v709 = vadd.f32 0.0, %v708
    %710 = vdwg.mxu0
    %711 = vrot.lane.b32.xlu0 %v88, 40
    %v712 = vpop.permute.xlu0 %711
    %v715 = vsel %vm93, %v684, 0
    %717 = vmatpush.msra.mxu0 0.0
    %718 = vmatpush.msra.mxu0 0.0
    %719 = vmatpush.msra.mxu0 0.0
    %720 = vmatpush.msra.mxu0 0.0
    %721 = vmatpush.msra.mxu0 0.0
    %722 = vmatpush.msra.mxu0 0.0
    %723 = vmatpush.msra.mxu0 0.0
    %724 = vmatpush.msra.mxu0 0.0
    %725 = vmatpush.msra.mxu0 0.0
    %726 = vmatpush.msra.mxu0 0.0
    %727 = vmatpush.msra.mxu0 0.0
    %728 = vmatpush.msra.mxu0 0.0
    %729 = vmatpush.msra.mxu0 0.0
    %730 = vmatpush.msra.mxu0 0.0
    %731 = vmatpush.msra.mxu0 0.0
    %732 = vmatpush.msra.mxu0 %v712
    %733 = vmatmul.f32.gmra.mxu0 %v715
    %v734 = vpop.f32.mrf.mxu0
    %v735 = vadd.f32 0.0, %v734
    %736 = vdwg.mxu0
    %739 = vrot.lane.b32.xlu0 %v709, 24
    %v740 = vpop.permute.xlu0 %739
    %741 = vrot.lane.b32.xlu0 %v735, 24
    %v742 = vpop.permute.xlu0 %741
    %vm745 = vcmask 261312
    %746 = vst.msk [vmem:[#allocation2] sm:$0xff] %vm745, %v740
    %747 = vst.msk [vmem:[#allocation2 + $0x8] sm:$0xff] %vm745, %v742
    %v748 = vld [vmem:[#allocation2] sm:$0xff]
    %v749 = vld [vmem:[#allocation2 + $0x8] sm:$0xff]
    %v750 = vld [vmem:[%s4] sm:$0xff]
    %v751 = vld [vmem:[%s4 + $0x8] sm:$0xff]
    %v752 = vld [vmem:[%s4 + $0x10] sm:$0xff]
    %v753 = vld [vmem:[%s4 + $0x18] sm:$0xff]
    %v754 = vld [vmem:[%s5] sm:$0x1]
    %v756 = vperm.slane %v754, 0
    %v759 = vsel %vm60, %v748, 0
    %v762 = vsel %vm60, %v749, 0
    %764 = vmatpush.msra.mxu0 0.0
    %765 = vmatpush.msra.mxu0 0.0
    %766 = vmatpush.msra.mxu0 0.0
    %767 = vmatpush.msra.mxu0 0.0
    %768 = vmatpush.msra.mxu0 0.0
    %769 = vmatpush.msra.mxu0 0.0
    %770 = vmatpush.msra.mxu0 0.0
    %771 = vmatpush.msra.mxu0 0.0
    %772 = vmatpush.msra.mxu0 0.0
    %773 = vmatpush.msra.mxu0 0.0
    %774 = vmatpush.msra.mxu0 0.0
    %775 = vmatpush.msra.mxu0 0.0
    %776 = vmatpush.msra.mxu0 %v753
    %777 = vmatpush.msra.mxu0 %v752
    %778 = vmatpush.msra.mxu0 %v751
    %779 = vmatpush.msra.mxu0 %v750
    %780 = vmatmul.f32.gmra.mxu0 %v759
    %v781 = vpop.f32.mrf.mxu0
    %v782 = vadd.f32 %v756, %v781
    %783 = vmatmul.f32.gmra.mxu0 %v762
    %v784 = vpop.f32.mrf.mxu0
    %v785 = vadd.f32 %v756, %v784
    %786 = vdwg.mxu0
    %v787 = vadd.f32 %v782, %v48
    %v788 = vadd.f32 %v785, %v49
    %v789 = vld [vmem:[%s6] sm:$0x1]
    %v790 = vld [vmem:[%s7] sm:$0x1]
    %v791 = vsel %vm60, %v787, 0.0
    %792 = vadd.xlane.f32.xlu0 %v791
    %v793 = vpop.xlane.xlu0 %792
    %v794 = vsel %vm60, %v788, 0.0
    %795 = vadd.xlane.f32.xlu0 %v794
    %v796 = vpop.xlane.xlu0 %795
    %v797 = vrcp.pop 32.0
    %v798 = vmul.f32 32.0, %v797
    %v799 = vsub.f32 1.0, %v798
    %v800 = vmul.f32 %v797, %v799
    %v801 = vadd.f32 %v797, %v800
    %vm802 = vweird.f32 %v797
    %v803 = vsel %vm802, %v797, %v801
    %v804 = vmul.f32 %v793, %v803
    %v805 = vmul.f32 %v796, %v803
    %v806 = vsub.f32 %v787, %v804
    %v807 = vsub.f32 %v788, %v805
    %v808 = vmul.f32 %v806, %v806
    %v809 = vmul.f32 %v807, %v807
    %v810 = vsel %vm60, %v808, 0.0
    %811 = vadd.xlane.f32.xlu0 %v810
    %v812 = vpop.xlane.xlu0 %811
    %v813 = vsel %vm60, %v809, 0.0
    %814 = vadd.xlane.f32.xlu0 %v813
    %v815 = vpop.xlane.xlu0 %814
    %v816 = vmul.f32 %v812, %v803
    %v817 = vmul.f32 %v815, %v803
    %v818 = vadd.f32 %v816, 1e-12
    %v819 = vadd.f32 %v817, 1e-12
    %v820 = vrsqrt.pop %v818
    %v821 = vmul.f32 %v820, %v818
    %v822 = vmul.f32 %v821, %v820
    %v823 = vmul.f32 0.5, %v822
    %v824 = vsub.f32 1.5, %v823
    %v825 = vmul.f32 %v820, %v824
    %vm826 = vweird.f32 %v818
    %vm827 = vweird.f32 %v820
    %vm828 = vmor %vm826, %vm827
    %v829 = vsel %vm828, %v820, %v825
    %v830 = vrsqrt.pop %v819
    %v831 = vmul.f32 %v830, %v819
    %v832 = vmul.f32 %v831, %v830
    %v833 = vmul.f32 0.5, %v832
    %v834 = vsub.f32 1.5, %v833
    %v835 = vmul.f32 %v830, %v834
    %vm836 = vweird.f32 %v819
    %vm837 = vweird.f32 %v830
    %vm838 = vmor %vm836, %vm837
    %v839 = vsel %vm838, %v830, %v835
    %v840 = vmul.f32 %v806, %v829
    %v841 = vmul.f32 %v807, %v839
    %v843 = vperm.slane %v789, 0
    %v845 = vmul.f32 %v843, %v840
    %v846 = vmul.f32 %v843, %v841
    %v848 = vperm.slane %v790, 0
    %v850 = vadd.f32 %v845, %v848
    %v851 = vadd.f32 %v846, %v848
    %v852 = vld [vmem:[%s8] sm:$0xff]
    %v853 = vld [vmem:[%s8 + $0x8] sm:$0xff]
    %v854 = vld [vmem:[%s8 + $0x10] sm:$0xff]
    %v855 = vld [vmem:[%s8 + $0x18] sm:$0xff]
    %v856 = vld [vmem:[%s9] sm:$0x1]
    %v858 = vperm.slane %v856, 0
    %v861 = vsel %vm60, %v850, 0
    %v864 = vsel %vm60, %v851, 0
    %866 = vmatpush.msra.mxu0 0.0
    %867 = vmatpush.msra.mxu0 0.0
    %868 = vmatpush.msra.mxu0 0.0
    %869 = vmatpush.msra.mxu0 0.0
    %870 = vmatpush.msra.mxu0 0.0
    %871 = vmatpush.msra.mxu0 0.0
    %872 = vmatpush.msra.mxu0 0.0
    %873 = vmatpush.msra.mxu0 0.0
    %874 = vmatpush.msra.mxu0 0.0
    %875 = vmatpush.msra.mxu0 0.0
    %876 = vmatpush.msra.mxu0 0.0
    %877 = vmatpush.msra.mxu0 0.0
    %878 = vmatpush.msra.mxu0 %v855
    %879 = vmatpush.msra.mxu0 %v854
    %880 = vmatpush.msra.mxu0 %v853
    %881 = vmatpush.msra.mxu0 %v852
    %882 = vmatmul.f32.gmra.mxu0 %v861
    %v883 = vpop.f32.mrf.mxu0
    %v884 = vadd.f32 %v858, %v883
    %885 = vmatmul.f32.gmra.mxu0 %v864
    %v886 = vpop.f32.mrf.mxu0
    %v887 = vadd.f32 %v858, %v886
    %888 = vdwg.mxu0
    %v889 = vmax.f32 %v884, 0.0
    %v890 = vmax.f32 %v887, 0.0
    %v891 = vld [vmem:[%s10] sm:$0xff]
    %v892 = vld [vmem:[%s10 + $0x8] sm:$0xff]
    %v893 = vld [vmem:[%s10 + $0x10] sm:$0xff]
    %v894 = vld [vmem:[%s10 + $0x18] sm:$0xff]
    %v895 = vld [vmem:[%s10 + $0x20] sm:$0xff]
    %v896 = vld [vmem:[%s10 + $0x28] sm:$0xff]
    %v897 = vld [vmem:[%s10 + $0x30] sm:$0xff]
    %v898 = vld [vmem:[%s10 + $0x38] sm:$0xff]
    %v899 = vld [vmem:[%s11] sm:$0x1]
    %v901 = vperm.slane %v899, 0
    %vm903 = vcmask 523264
    %v905 = vsel %vm903, %v889, 0
    %v908 = vsel %vm903, %v890, 0
    %910 = vmatpush.msra.mxu0 0.0
    %911 = vmatpush.msra.mxu0 0.0
    %912 = vmatpush.msra.mxu0 0.0
    %913 = vmatpush.msra.mxu0 0.0
    %914 = vmatpush.msra.mxu0 0.0
    %915 = vmatpush.msra.mxu0 0.0
    %916 = vmatpush.msra.mxu0 0.0
    %917 = vmatpush.msra.mxu0 0.0
    %918 = vmatpush.msra.mxu0 %v898
    %919 = vmatpush.msra.mxu0 %v897
    %920 = vmatpush.msra.mxu0 %v896
    %921 = vmatpush.msra.mxu0 %v895
    %922 = vmatpush.msra.mxu0 %v894
    %923 = vmatpush.msra.mxu0 %v893
    %924 = vmatpush.msra.mxu0 %v892
    %925 = vmatpush.msra.mxu0 %v891
    %926 = vmatmul.f32.gmra.mxu0 %v905
    %v927 = vpop.f32.mrf.mxu0
    %v928 = vadd.f32 %v901, %v927
    %929 = vmatmul.f32.gmra.mxu0 %v908
    %v930 = vpop.f32.mrf.mxu0
    %v931 = vadd.f32 %v901, %v930
    %932 = vdwg.mxu0
    %v933 = vadd.f32 %v928, %v850
    %v934 = vadd.f32 %v931, %v851
    %v935 = vld [vmem:[%s12] sm:$0x1]
    %v936 = vld [vmem:[%s13] sm:$0x1]
    %v937 = vsel %vm60, %v933, 0.0
    %938 = vadd.xlane.f32.xlu0 %v937
    %v939 = vpop.xlane.xlu0 %938
    %v940 = vsel %vm60, %v934, 0.0
    %941 = vadd.xlane.f32.xlu0 %v940
    %v942 = vpop.xlane.xlu0 %941
    %v943 = vmul.f32 %v939, %v803
    %v944 = vmul.f32 %v942, %v803
    %v945 = vsub.f32 %v933, %v943
    %v946 = vsub.f32 %v934, %v944
    %v947 = vmul.f32 %v945, %v945
    %v948 = vmul.f32 %v946, %v946
    %v949 = vsel %vm60, %v947, 0.0
    %950 = vadd.xlane.f32.xlu0 %v949
    %v951 = vpop.xlane.xlu0 %950
    %v952 = vsel %vm60, %v948, 0.0
    %953 = vadd.xlane.f32.xlu0 %v952
    %v954 = vpop.xlane.xlu0 %953
    %v955 = vmul.f32 %v951, %v803
    %v956 = vmul.f32 %v954, %v803
    %v957 = vadd.f32 %v955, 1e-12
    %v958 = vadd.f32 %v956, 1e-12
    %v959 = vrsqrt.pop %v957
    %v960 = vmul.f32 %v959, %v957
    %v961 = vmul.f32 %v960, %v959
    %v962 = vmul.f32 0.5, %v961
    %v963 = vsub.f32 1.5, %v962
    %v964 = vmul.f32 %v959, %v963
    %vm965 = vweird.f32 %v957
    %vm966 = vweird.f32 %v959
    %vm967 = vmor %vm965, %vm966
    %v968 = vsel %vm967, %v959, %v964
    %v969 = vrsqrt.pop %v958
    %v970 = vmul.f32 %v969, %v958
    %v971 = vmul.f32 %v970, %v969
    %v972 = vmul.f32 0.5, %v971
    %v973 = vsub.f32 1.5, %v972
    %v974 = vmul.f32 %v969, %v973
    %vm975 = vweird.f32 %v958
    %vm976 = vweird.f32 %v969
    %vm977 = vmor %vm975, %vm976
    %v978 = vsel %vm977, %v969, %v974
    %v979 = vmul.f32 %v945, %v968
    %v980 = vmul.f32 %v946, %v978
    %v982 = vperm.slane %v935, 0
    %v984 = vmul.f32 %v982, %v979
    %v985 = vmul.f32 %v982, %v980
    %v987 = vperm.slane %v936, 0
    %v989 = vadd.f32 %v984, %v987
    %v990 = vadd.f32 %v985, %v987
    %991 = vst.msk [vmem:[#allocation3] sm:$0xff] %vm60, %v989
    %992 = vst.msk [vmem:[#allocation3 + $0x8] sm:$0xff] %vm60, %v990
    // Predicated region
    $region58: #{encoder_forward.1} parent=1 // pred_check
      _
    $region59: #{encoder_forward.1} parent=1 // pred_check_branch
      %994 = sbr.rel (0) target = $region61
    $region60: #{encoder_forward.1} parent=1 // pred_region
      %996 = vsyncadd [#allocation4], 0
      %s997 = sshll.u32 [#allocation3], 4
      %s998 = int_to_ptr.vmem [resolvable:$true] %s997
      %s999 = sshll.u32 %s14, 4
      %s1000 = int_to_ptr.hbm [resolvable:$true] %s999
      %1005 = dma.vmem_to_hbm [thread:$0]  %s998, 256, %s1000, [#allocation4], 128, 128, 8
    $region61: #{encoder_forward.1} parent=1 // pred_fallthru
      _
    // Predicated region
    $region62: #{encoder_forward.1} parent=1 // pred_check
      _
    $region63: #{encoder_forward.1} parent=1 // pred_check_branch
      %1007 = sbr.rel (0) target = $region65
    $region64: #{encoder_forward.1} parent=1 // pred_region
      %1009 = dma.done [#allocation4], 256
    $region65: #{encoder_forward.1} parent=1 // pred_fallthru
      _
    %1010 = vsyncpa [#allocation4], 1

</llo_original>
